<compile_context>
chip_gen: v7x
topology: tpu7x:2x2x1
jax: 0.10.0
libtpu: 0.0.40
codegen_flags: <defaults>
</compile_context>

<pallas_src>
import functools

import jax
import jax.numpy as jnp
import numpy as np
from jax import lax
from jax.experimental import pallas as pl
from jax.experimental.pallas import tpu as pltpu


# ----------------------------------------------------------------------------
# Host-side "glue": scalar projections (mirrors DSRL.projection_w/_b).
# ----------------------------------------------------------------------------
def projection_w(w):
    rw = [0.0, 0.0]
    for i in range(2):
        rw[i] = float(w[i]) if w[i] > 1e-4 else 1e-4
    if rw[1] > 1.0:
        rw[1] = 1.0
    return rw


def projection_b(w, b):
    rb = [0.0, 0.0]
    b0, b1 = float(b[0]), float(b[1])
    w0 = float(w[0])
    if 0.0 < w0 <= 1.0:
        if b1 >= b0 and b0 >= 0.0 and b1 >= 0.0:
            rb = [b0, b1]
        elif b0 < 0.0 and b1 > 0.0:
            rb = [0.0, b1]
        elif b1 <= min(0.0, -b0):
            rb = [0.0, 0.0]
        elif b0 >= abs(b1):
            rb = [(b0 + b1) / 2.0, (b0 + b1) / 2.0]
    else:
        denom = w0 * w0 + (w0 - 1.0) * (w0 - 1.0)
        xi = [(w0 - 1.0) * (w0 - 1.0) / denom,
              w0 * (w0 - 1.0) / denom,
              w0 * w0 / denom]
        if b1 >= 0.0 and b1 >= b0 and b0 >= (w0 - 1.0) / w0 * b1:
            rb = [b0, b1]
        elif b0 < (w0 - 1.0) / w0 * b1 and b0 > w0 / (1.0 - w0) * b1:
            rb = [xi[0] * b0 + xi[1] * b1, xi[1] * b0 + xi[2] * b1]
        elif b0 <= w0 / (1.0 - w0) * b1 and b1 >= 0.0:
            rb = [0.0, 0.0]
        elif b1 <= min(0.0, -b0):
            rb = [0.0, 0.0]
        elif b0 >= abs(b1):
            rb = [(b0 + b1) / 2.0, (b0 + b1) / 2.0]
    return rb


# ----------------------------------------------------------------------------
# Pallas kernel: unrolled DSRL forward on one row-tile of W, chunked over
# sublanes so the per-stage working set stays in vregs.
#
# params_ref (SMEM, f32[7]) = [w0, w1, b0, b1, invL, b1-b0, alpha=1-1/L]
# w_ref   : (TM, N)                 input tile of W
# out_ref : (block_num+1, TM, N)    stacked stages for this tile
# ----------------------------------------------------------------------------
def dsrl_kernel(params_ref, w_ref, out_ref, *, block_num, chunk):
    # Scalars read once (kept as SMEM scalars; VPU handles scalar operands).
    w0 = params_ref[0]
    w1 = params_ref[1]
    b0 = params_ref[2]
    b1 = params_ref[3]
    inv_l = params_ref[4]
    b1mb0 = params_ref[5]          # b1 - b0, precomputed on host
    alpha = params_ref[6]          # 1 - 1/L, precomputed on host

    sign_mask = jnp.uint32(0x80000000)
    zero = jnp.float32(0.0)

    def activation(x):
        # Piecewise-linear soft-threshold, odd-symmetric in x.
        # Ramp form (min/max only) on |x|; f >= 0 since w0,w1 > 0 and
        # b1 >= b0 >= 0, so the sign of x can be restored with a bit-OR.
        u = jnp.abs(x)
        f = (w0 * jnp.minimum(jnp.maximum(u - b0, zero), b1mb0)
             + w1 * jnp.maximum(u - b1, zero))
        sgn = pltpu.bitcast(x, jnp.uint32) & sign_mask
        return pltpu.bitcast(pltpu.bitcast(f, jnp.uint32) | sgn, jnp.float32)

    tm = w_ref.shape[0]
    n_chunks = tm // chunk

    def body(c, carry):
        r0 = c * chunk
        if not isinstance(c, int):
            r0 = pl.multiple_of(r0, chunk)
        w_rows = w_ref[pl.ds(r0, chunk), :]
        wc = w_rows * inv_l                      # W / L, hoisted out of stages
        cur = activation(w_rows)
        out_ref[0, pl.ds(r0, chunk), :] = cur.astype(out_ref.dtype)
        for i in range(block_num):               # block_num: small constant
            cur = cur * alpha + wc               # == cur - (cur - W)/L
            cur = activation(cur)
            out_ref[i + 1, pl.ds(r0, chunk), :] = cur.astype(out_ref.dtype)
        return carry

    if n_chunks == 1:
        body(0, None)
    else:
        lax.fori_loop(0, n_chunks, body, None, unroll=(n_chunks <= 8))


def _choose_chunk(tm, N):
    # Keep each live chunk array (W, Wc, cur) at <= ~16 KiB (~4 vregs) so the
    # whole stage chain fits comfortably in the 64-vreg register file.
    budget_rows = max(8, (16 * 1024) // (N * 4))
    for c in (32, 16, 8):
        if c <= budget_rows and tm % c == 0:
            return c
    return 8


def _choose_tm(M, N, block_num, vmem_budget_bytes, out_itemsize):
    # Double-buffered per-step VMEM footprint:
    #   input  : 2 * tm * N * 4 bytes
    #   output : 2 * (block_num + 1) * tm * N * out_itemsize bytes
    per_row = 2 * N * (4 + (block_num + 1) * out_itemsize)
    vmem_cap = max(8, (vmem_budget_bytes // per_row) // 8 * 8)

    candidates = [t for t in range(8, min(M, vmem_cap) + 1, 8) if M % t == 0]
    if not candidates:
        return min(M, 8)

    def score(t):
        steps = M // t
        s = 0.0
        if 4 <= steps <= 8:          # steady-state pipeline, overlap writeback
            s += 100.0
        else:
            s -= abs(steps - 6)
        if steps % 2 == 0:           # even split across v7x's 2 TensorCores
            s += 10.0
        if 256 <= t <= 512:          # near-roofline row tiles when M allows
            s += 5.0
        if t * N * 4 >= 64 * 1024:   # lane/sublane-dense output slab
            s += 2.0
        return s + t * 1e-6          # tie-break: prefer the larger tile

    return max(candidates, key=score)


def dsrl_forward(W, w, b, L, block_num, *, tm=None,
                 vmem_budget_bytes=12 * 1024 * 1024,
                 out_dtype=jnp.float32):
    """Returns jnp array of shape (block_num+1, M, N) == stacked W_list."""
    M, N = W.shape
    assert M % 8 == 0 and N % 128 == 0, "array must respect (8,128) layout"
    assert float(L) != 0.0, "L must be nonzero"

    pw = projection_w(w)
    pb = projection_b(pw, b)
    # Invariants required by the sign-bit rewrite in the kernel.
    assert pw[0] > 0.0 and pw[1] > 0.0
    assert pb[1] >= pb[0] >= 0.0, "projection_b invariant violated"

    b0_f = np.float32(pb[0])
    b1_f = np.float32(pb[1])
    inv_l = np.float32(1.0) / np.float32(L)
    alpha = np.float32(1.0) - inv_l
    params = jnp.array([pw[0], pw[1], b0_f, b1_f, inv_l,
                        b1_f - b0_f, alpha], dtype=jnp.float32)

    out_itemsize = jnp.dtype(out_dtype).itemsize
    if tm is None:
        tm = _choose_tm(M, N, block_num, vmem_budget_bytes, out_itemsize)
    assert M % tm == 0
    chunk = _choose_chunk(tm, N)

    kernel = functools.partial(dsrl_kernel, block_num=block_num, chunk=chunk)

    # Advisory cost hint: elementwise-only workload; writes dominate traffic.
    flops = int(M) * int(N) * (11 * (block_num + 1) + 2 * block_num + 1)
    bytes_accessed = int(M) * int(N) * (4 + out_itemsize * (block_num + 1))
    cost = pl.CostEstimate(flops=flops, transcendentals=0,
                           bytes_accessed=bytes_accessed)

    # Scoped-VMEM limit from the actual double-buffered footprint + headroom
    # (portable to v7x's smaller VMEM and v5e's 16 MiB scoped default).
    block_bytes = tm * N * (4 + (block_num + 1) * out_itemsize)
    vmem_limit = int(2 * block_bytes * 1.25) + (1 << 20)
    vmem_limit = max(2 * 1024 * 1024, min(vmem_limit, 32 * 1024 * 1024))

    return pl.pallas_call(
        kernel,
        out_shape=jax.ShapeDtypeStruct((block_num + 1, M, N), out_dtype),
        grid_spec=pltpu.PrefetchScalarGridSpec(
            num_scalar_prefetch=0,
            grid=(M // tm,),
            in_specs=[
                pl.BlockSpec(memory_space=pltpu.SMEM),            # scalar params
                pl.BlockSpec((tm, N), lambda i: (i, 0)),          # W row tile
            ],
            out_specs=pl.BlockSpec((block_num + 1, tm, N),
                                   lambda i: (0, i, 0)),
        ),
        compiler_params=pltpu.CompilerParams(
            dimension_semantics=("parallel",),
            vmem_limit_bytes=vmem_limit),
        cost_estimate=cost,
    )(params, W.astype(jnp.float32))


# ----------------------------------------------------------------------------
# Pure-JAX reference (mirrors the PyTorch forward exactly, mask-multiply form)
# ----------------------------------------------------------------------------
def dsrl_forward_ref(W, w, b, L, block_num):
    pw = projection_w(w)
    pb = projection_b(pw, b)
    w0, w1, b0, b1 = pw[0], pw[1], pb[0], pb[1]

    def act(x):
        m1 = (x >= b1).astype(jnp.float32)
        m2 = ((x < b1) & (x >= b0)).astype(jnp.float32)
        m4 = ((x >= -b1) & (x < -b0)).astype(jnp.float32)
        m5 = (x < -b1).astype(jnp.float32)
        return ((w1 * (x - b1) + w0 * (b1 - b0)) * m1
                + w0 * (x - b0) * m2
                + w0 * (x + b0) * m4
                + (w1 * (x + b1) + w0 * (b0 - b1)) * m5)

    cur = act(W)
    outs = [cur]
    for _ in range(block_num):
        cur = outs[-1] - (outs[-1] - W) / L
        cur = act(cur)
        outs.append(cur)
    return jnp.stack(outs, axis=0)


if __name__ == "__main__":
    # Deterministic DSRL "parameters" (match nn.Parameter init values).
    w_param = [1.0, 1.0]      # self.w init
    b_param = [1.0, 2.0]      # self.b init (init_para = [1, 2])
    L_param = 1.0             # self.L from para_init()
    block_num = 4

    # Small synthetic similarity matrix W (nc x nc).
    nc = 128
    key = jax.random.PRNGKey(0)
    W = jax.random.normal(key, (nc, nc), dtype=jnp.float32) * 2.0

    out = dsrl_forward(W, w_param, b_param, L_param, block_num)
    out = jax.block_until_ready(out)

    ref = dsrl_forward_ref(W, w_param, b_param, L_param, block_num)
    # Note: ramp-form activation, sign-bit restore and alpha/invL mixing differ
    # from the mask-multiply reference by at most ~1 ulp at branch boundaries.
    np.testing.assert_allclose(np.asarray(out), np.asarray(ref),
                               rtol=1e-5, atol=1e-6)

    # TODO(synk): training loop / spectral clustering (Adam, eig, clustering
    # metrics) are host-side and intentionally not ported to Pallas.

    print("KERNEL_OK")
</pallas_src>

<mosaic_0001>
module attributes {stable_mosaic.version = 11 : i64} {
  func.func @dsrl_kernel(%arg0: i32, %arg1: memref<7xf32, #tpu.memory_space<smem>>, %arg2: memref<32x128xf32, #tpu.memory_space<vmem>>, %arg3: memref<5x32x128xf32, #tpu.memory_space<vmem>>) attributes {dimension_semantics = [#tpu.dimension_semantics<parallel>], iteration_bounds = array<i64: 4>, scalar_prefetch = 0 : i64, scratch_operands = 0 : i64, tpu.core_type = #tpu.core_type<tc>, window_params = [{transform_indices = @transform_0, window_bounds = array<i64: 7>}, {transform_indices = @transform_1, window_bounds = array<i64: 32, 128>}, {transform_indices = @transform_2, window_bounds = array<i64: 5, 32, 128>}]} {
    %c0 = arith.constant 0 : index
    %0 = memref.load %arg1[%c0] : memref<7xf32, #tpu.memory_space<smem>>
    %c1 = arith.constant 1 : index
    %1 = memref.load %arg1[%c1] : memref<7xf32, #tpu.memory_space<smem>>
    %c2 = arith.constant 2 : index
    %2 = memref.load %arg1[%c2] : memref<7xf32, #tpu.memory_space<smem>>
    %c3 = arith.constant 3 : index
    %3 = memref.load %arg1[%c3] : memref<7xf32, #tpu.memory_space<smem>>
    %c4 = arith.constant 4 : index
    %4 = memref.load %arg1[%c4] : memref<7xf32, #tpu.memory_space<smem>>
    %c5 = arith.constant 5 : index
    %5 = memref.load %arg1[%c5] : memref<7xf32, #tpu.memory_space<smem>>
    %c6 = arith.constant 6 : index
    %6 = memref.load %arg1[%c6] : memref<7xf32, #tpu.memory_space<smem>>
    %c0_0 = arith.constant 0 : index
    %c0_1 = arith.constant 0 : index
    %7 = vector.load %arg2[%c0_0, %c0_1] : memref<32x128xf32, #tpu.memory_space<vmem>>, vector<32x128xf32>
    %8 = vector.broadcast %4 : f32 to vector<32x128xf32>
    %9 = arith.mulf %7, %8 : vector<32x128xf32>
    %10 = math.absf %7 : vector<32x128xf32>
    %11 = vector.broadcast %2 : f32 to vector<32x128xf32>
    %12 = arith.subf %10, %11 : vector<32x128xf32>
    %cst = arith.constant 0.000000e+00 : f32
    %13 = vector.broadcast %cst : f32 to vector<32x128xf32>
    %14 = arith.maximumf %12, %13 : vector<32x128xf32>
    %15 = vector.broadcast %5 : f32 to vector<32x128xf32>
    %16 = arith.minimumf %14, %15 : vector<32x128xf32>
    %17 = vector.broadcast %0 : f32 to vector<32x128xf32>
    %18 = arith.mulf %17, %16 : vector<32x128xf32>
    %19 = vector.broadcast %3 : f32 to vector<32x128xf32>
    %20 = arith.subf %10, %19 : vector<32x128xf32>
    %cst_2 = arith.constant 0.000000e+00 : f32
    %21 = vector.broadcast %cst_2 : f32 to vector<32x128xf32>
    %22 = arith.maximumf %20, %21 : vector<32x128xf32>
    %23 = vector.broadcast %1 : f32 to vector<32x128xf32>
    %24 = arith.mulf %23, %22 : vector<32x128xf32>
    %25 = arith.addf %18, %24 : vector<32x128xf32>
    %26 = tpu.bitcast %7 : vector<32x128xf32> -> vector<32x128xi32>
    %c-2147483648_i32 = arith.constant -2147483648 : i32
    %27 = vector.broadcast %c-2147483648_i32 : i32 to vector<32x128xi32>
    %28 = arith.andi %26, %27 : vector<32x128xi32>
    %29 = tpu.bitcast %25 : vector<32x128xf32> -> vector<32x128xi32>
    %30 = arith.ori %29, %28 : vector<32x128xi32>
    %31 = tpu.bitcast %30 : vector<32x128xi32> -> vector<32x128xf32>
    %c0_3 = arith.constant 0 : index
    %c0_4 = arith.constant 0 : index
    %c0_5 = arith.constant 0 : index
    %32 = vector.load %arg3[%c0_3, %c0_4, %c0_5] : memref<5x32x128xf32, #tpu.memory_space<vmem>>, vector<1x32x128xf32>
    %33 = vector.shape_cast %32 : vector<1x32x128xf32> to vector<32x128xf32>
    %34 = vector.shape_cast %31 : vector<32x128xf32> to vector<1x32x128xf32>
    tpu.vector_store %arg3[%c0_3, %c0_4, %c0_5], %34 {strides = array<i32>} : memref<5x32x128xf32, #tpu.memory_space<vmem>>, vector<1x32x128xf32>,
    %35 = vector.broadcast %6 : f32 to vector<32x128xf32>
    %36 = arith.mulf %31, %35 : vector<32x128xf32>
    %37 = arith.addf %36, %9 : vector<32x128xf32>
    %38 = math.absf %37 : vector<32x128xf32>
    %39 = vector.broadcast %2 : f32 to vector<32x128xf32>
    %40 = arith.subf %38, %39 : vector<32x128xf32>
    %cst_6 = arith.constant 0.000000e+00 : f32
    %41 = vector.broadcast %cst_6 : f32 to vector<32x128xf32>
    %42 = arith.maximumf %40, %41 : vector<32x128xf32>
    %43 = vector.broadcast %5 : f32 to vector<32x128xf32>
    %44 = arith.minimumf %42, %43 : vector<32x128xf32>
    %45 = vector.broadcast %0 : f32 to vector<32x128xf32>
    %46 = arith.mulf %45, %44 : vector<32x128xf32>
    %47 = vector.broadcast %3 : f32 to vector<32x128xf32>
    %48 = arith.subf %38, %47 : vector<32x128xf32>
    %cst_7 = arith.constant 0.000000e+00 : f32
    %49 = vector.broadcast %cst_7 : f32 to vector<32x128xf32>
    %50 = arith.maximumf %48, %49 : vector<32x128xf32>
    %51 = vector.broadcast %1 : f32 to vector<32x128xf32>
    %52 = arith.mulf %51, %50 : vector<32x128xf32>
    %53 = arith.addf %46, %52 : vector<32x128xf32>
    %54 = tpu.bitcast %37 : vector<32x128xf32> -> vector<32x128xi32>
    %c-2147483648_i32_8 = arith.constant -2147483648 : i32
    %55 = vector.broadcast %c-2147483648_i32_8 : i32 to vector<32x128xi32>
    %56 = arith.andi %54, %55 : vector<32x128xi32>
    %57 = tpu.bitcast %53 : vector<32x128xf32> -> vector<32x128xi32>
    %58 = arith.ori %57, %56 : vector<32x128xi32>
    %59 = tpu.bitcast %58 : vector<32x128xi32> -> vector<32x128xf32>
    %c1_9 = arith.constant 1 : index
    %c0_10 = arith.constant 0 : index
    %c0_11 = arith.constant 0 : index
    %60 = vector.load %arg3[%c1_9, %c0_10, %c0_11] : memref<5x32x128xf32, #tpu.memory_space<vmem>>, vector<1x32x128xf32>
    %61 = vector.shape_cast %60 : vector<1x32x128xf32> to vector<32x128xf32>
    %62 = vector.shape_cast %59 : vector<32x128xf32> to vector<1x32x128xf32>
    tpu.vector_store %arg3[%c1_9, %c0_10, %c0_11], %62 {strides = array<i32>} : memref<5x32x128xf32, #tpu.memory_space<vmem>>, vector<1x32x128xf32>,
    %63 = vector.broadcast %6 : f32 to vector<32x128xf32>
    %64 = arith.mulf %59, %63 : vector<32x128xf32>
    %65 = arith.addf %64, %9 : vector<32x128xf32>
    %66 = math.absf %65 : vector<32x128xf32>
    %67 = vector.broadcast %2 : f32 to vector<32x128xf32>
    %68 = arith.subf %66, %67 : vector<32x128xf32>
    %cst_12 = arith.constant 0.000000e+00 : f32
    %69 = vector.broadcast %cst_12 : f32 to vector<32x128xf32>
    %70 = arith.maximumf %68, %69 : vector<32x128xf32>
    %71 = vector.broadcast %5 : f32 to vector<32x128xf32>
    %72 = arith.minimumf %70, %71 : vector<32x128xf32>
    %73 = vector.broadcast %0 : f32 to vector<32x128xf32>
    %74 = arith.mulf %73, %72 : vector<32x128xf32>
    %75 = vector.broadcast %3 : f32 to vector<32x128xf32>
    %76 = arith.subf %66, %75 : vector<32x128xf32>
    %cst_13 = arith.constant 0.000000e+00 : f32
    %77 = vector.broadcast %cst_13 : f32 to vector<32x128xf32>
    %78 = arith.maximumf %76, %77 : vector<32x128xf32>
    %79 = vector.broadcast %1 : f32 to vector<32x128xf32>
    %80 = arith.mulf %79, %78 : vector<32x128xf32>
    %81 = arith.addf %74, %80 : vector<32x128xf32>
    %82 = tpu.bitcast %65 : vector<32x128xf32> -> vector<32x128xi32>
    %c-2147483648_i32_14 = arith.constant -2147483648 : i32
    %83 = vector.broadcast %c-2147483648_i32_14 : i32 to vector<32x128xi32>
    %84 = arith.andi %82, %83 : vector<32x128xi32>
    %85 = tpu.bitcast %81 : vector<32x128xf32> -> vector<32x128xi32>
    %86 = arith.ori %85, %84 : vector<32x128xi32>
    %87 = tpu.bitcast %86 : vector<32x128xi32> -> vector<32x128xf32>
    %c2_15 = arith.constant 2 : index
    %c0_16 = arith.constant 0 : index
    %c0_17 = arith.constant 0 : index
    %88 = vector.load %arg3[%c2_15, %c0_16, %c0_17] : memref<5x32x128xf32, #tpu.memory_space<vmem>>, vector<1x32x128xf32>
    %89 = vector.shape_cast %88 : vector<1x32x128xf32> to vector<32x128xf32>
    %90 = vector.shape_cast %87 : vector<32x128xf32> to vector<1x32x128xf32>
    tpu.vector_store %arg3[%c2_15, %c0_16, %c0_17], %90 {strides = array<i32>} : memref<5x32x128xf32, #tpu.memory_space<vmem>>, vector<1x32x128xf32>,
    %91 = vector.broadcast %6 : f32 to vector<32x128xf32>
    %92 = arith.mulf %87, %91 : vector<32x128xf32>
    %93 = arith.addf %92, %9 : vector<32x128xf32>
    %94 = math.absf %93 : vector<32x128xf32>
    %95 = vector.broadcast %2 : f32 to vector<32x128xf32>
    %96 = arith.subf %94, %95 : vector<32x128xf32>
    %cst_18 = arith.constant 0.000000e+00 : f32
    %97 = vector.broadcast %cst_18 : f32 to vector<32x128xf32>
    %98 = arith.maximumf %96, %97 : vector<32x128xf32>
    %99 = vector.broadcast %5 : f32 to vector<32x128xf32>
    %100 = arith.minimumf %98, %99 : vector<32x128xf32>
    %101 = vector.broadcast %0 : f32 to vector<32x128xf32>
    %102 = arith.mulf %101, %100 : vector<32x128xf32>
    %103 = vector.broadcast %3 : f32 to vector<32x128xf32>
    %104 = arith.subf %94, %103 : vector<32x128xf32>
    %cst_19 = arith.constant 0.000000e+00 : f32
    %105 = vector.broadcast %cst_19 : f32 to vector<32x128xf32>
    %106 = arith.maximumf %104, %105 : vector<32x128xf32>
    %107 = vector.broadcast %1 : f32 to vector<32x128xf32>
    %108 = arith.mulf %107, %106 : vector<32x128xf32>
    %109 = arith.addf %102, %108 : vector<32x128xf32>
    %110 = tpu.bitcast %93 : vector<32x128xf32> -> vector<32x128xi32>
    %c-2147483648_i32_20 = arith.constant -2147483648 : i32
    %111 = vector.broadcast %c-2147483648_i32_20 : i32 to vector<32x128xi32>
    %112 = arith.andi %110, %111 : vector<32x128xi32>
    %113 = tpu.bitcast %109 : vector<32x128xf32> -> vector<32x128xi32>
    %114 = arith.ori %113, %112 : vector<32x128xi32>
    %115 = tpu.bitcast %114 : vector<32x128xi32> -> vector<32x128xf32>
    %c3_21 = arith.constant 3 : index
    %c0_22 = arith.constant 0 : index
    %c0_23 = arith.constant 0 : index
    %116 = vector.load %arg3[%c3_21, %c0_22, %c0_23] : memref<5x32x128xf32, #tpu.memory_space<vmem>>, vector<1x32x128xf32>
    %117 = vector.shape_cast %116 : vector<1x32x128xf32> to vector<32x128xf32>
    %118 = vector.shape_cast %115 : vector<32x128xf32> to vector<1x32x128xf32>
    tpu.vector_store %arg3[%c3_21, %c0_22, %c0_23], %118 {strides = array<i32>} : memref<5x32x128xf32, #tpu.memory_space<vmem>>, vector<1x32x128xf32>,
    %119 = vector.broadcast %6 : f32 to vector<32x128xf32>
    %120 = arith.mulf %115, %119 : vector<32x128xf32>
    %121 = arith.addf %120, %9 : vector<32x128xf32>
    %122 = math.absf %121 : vector<32x128xf32>
    %123 = vector.broadcast %2 : f32 to vector<32x128xf32>
    %124 = arith.subf %122, %123 : vector<32x128xf32>
    %cst_24 = arith.constant 0.000000e+00 : f32
    %125 = vector.broadcast %cst_24 : f32 to vector<32x128xf32>
    %126 = arith.maximumf %124, %125 : vector<32x128xf32>
    %127 = vector.broadcast %5 : f32 to vector<32x128xf32>
    %128 = arith.minimumf %126, %127 : vector<32x128xf32>
    %129 = vector.broadcast %0 : f32 to vector<32x128xf32>
    %130 = arith.mulf %129, %128 : vector<32x128xf32>
    %131 = vector.broadcast %3 : f32 to vector<32x128xf32>
    %132 = arith.subf %122, %131 : vector<32x128xf32>
    %cst_25 = arith.constant 0.000000e+00 : f32
    %133 = vector.broadcast %cst_25 : f32 to vector<32x128xf32>
    %134 = arith.maximumf %132, %133 : vector<32x128xf32>
    %135 = vector.broadcast %1 : f32 to vector<32x128xf32>
    %136 = arith.mulf %135, %134 : vector<32x128xf32>
    %137 = arith.addf %130, %136 : vector<32x128xf32>
    %138 = tpu.bitcast %121 : vector<32x128xf32> -> vector<32x128xi32>
    %c-2147483648_i32_26 = arith.constant -2147483648 : i32
    %139 = vector.broadcast %c-2147483648_i32_26 : i32 to vector<32x128xi32>
    %140 = arith.andi %138, %139 : vector<32x128xi32>
    %141 = tpu.bitcast %137 : vector<32x128xf32> -> vector<32x128xi32>
    %142 = arith.ori %141, %140 : vector<32x128xi32>
    %143 = tpu.bitcast %142 : vector<32x128xi32> -> vector<32x128xf32>
    %c4_27 = arith.constant 4 : index
    %c0_28 = arith.constant 0 : index
    %c0_29 = arith.constant 0 : index
    %144 = vector.load %arg3[%c4_27, %c0_28, %c0_29] : memref<5x32x128xf32, #tpu.memory_space<vmem>>, vector<1x32x128xf32>
    %145 = vector.shape_cast %144 : vector<1x32x128xf32> to vector<32x128xf32>
    %146 = vector.shape_cast %143 : vector<32x128xf32> to vector<1x32x128xf32>
    tpu.vector_store %arg3[%c4_27, %c0_28, %c0_29], %146 {strides = array<i32>} : memref<5x32x128xf32, #tpu.memory_space<vmem>>, vector<1x32x128xf32>,
    return
  }
  func.func @transform_0(%arg0: i32) -> i32 {
    %c0_i32 = arith.constant 0 : i32
    %c0_i32_0 = arith.constant 0 : i32
    return %c0_i32 : i32
  }
  func.func @transform_1(%arg0: i32) -> (i32, i32) {
    %c0_i32 = arith.constant 0 : i32
    %c0_i32_0 = arith.constant 0 : i32
    return %arg0, %c0_i32 : i32, i32
  }
  func.func @transform_2(%arg0: i32) -> (i32, i32, i32) {
    %c0_i32 = arith.constant 0 : i32
    %c0_i32_0 = arith.constant 0 : i32
    %c0_i32_1 = arith.constant 0 : i32
    return %c0_i32, %arg0, %c0_i32_0 : i32, i32, i32
  }
}

</mosaic_0001>

<llo_original>
// kernel: tpu_custom_call.1
$region0: #{tpu_custom_call.1}
  #allocation0 [shape = 'u32[]', space=smem, size = 0x4, offset = 0x4, fixed_abs, tag = 'smem constant byte address 0x4 - core index']
  #allocation1 [shape = 'u32[144,128]{1,0:T(1,128)}', space=vmem, size = 0x12000, scoped, tag = 'internal scratch']
  #allocation8 [shape = 's32[]', space=sflag, size = 0x4, offset = 0, fixed_abs, tag = 'sflag constant byte address 0x0 - dummy sync flag']
  %s0 = inlined_call_operand.hbm [shape: f32[7], index: 0, kind: input, shape index: {}]
  %s1 = inlined_call_operand.hbm [shape: f32[128,128], index: 1, kind: input, shape index: {}]
  %s2 = inlined_call_operand.hbm [shape: f32[5,128,128], index: 2, kind: output, shape index: {}]
  %s3 = sld [smem:[#allocation0]]
  $region49: #{tpu_custom_call.1} parent=0
    _
  %s5 = ssub.s32 1, %s3
  %s6 = scalar_select 0, %s5, %s3
  $region1: #{tpu_custom_call.1} parent=0
    #allocation2 [shape = 'u8[512]{0}', space=smem, size = 0x200, scoped, tag = 'input window, operand 0, single buffered']
    #allocation3 [shape = 's32[2]{0}', space=sflag, size = 0x8, scoped, tag = 'scoped memory for tpu_custom_call.1']
    #allocation4 [shape = 's32[2]{0}', space=sflag, size = 0x8, scoped, tag = 'scoped memory for tpu_custom_call.1']
    #allocation5 [shape = 's32[2]{0}', space=sflag, size = 0x8, scoped, tag = 'scoped memory for tpu_custom_call.1']
    #allocation6 [shape = 'u8[32768]{0}', space=vmem, size = 0x8000, scoped, tag = 'input window, operand 1']
    #allocation7 [shape = 'u8[163840]{0}', space=vmem, size = 0x28000, scoped, tag = 'output window, operand 0']
    %7 = vsyncpa [#allocation5], 0
    %8 = vsyncpa [#allocation3], 0
    %s9 = scalar_lea.sflag [#allocation3], 1
    %10 = vsyncpa %s9, 0
    %11 = vsyncpa [#allocation4], 0
    %s12 = scalar_lea.sflag [#allocation4], 1
    %13 = vsyncpa %s12, 0
    loop: start=0, step=1, limit=6
    $region2: #{tpu_custom_call.1} parent=1 // loop_pre_header
      _
    $region3: #{tpu_custom_call.1} parent=1 // loop_header
      %s15 = sphi 0, %s19
      %p16 = scmp.ge.s32.totalorder %s15, 6
      %s23 = sphi 0, %s23
      %s25 = sphi 0, %s23
      %s26 = sphi 0, %s25
      %s40 = sphi 0, %s26
      %s46 = sphi 0, %s48
      %s49 = sphi 0, %s46
      %s50 = sphi 0, %s49
      %s66 = sphi 0, %s50
      %s72 = sphi 0, %s74
      %s75 = sphi 0, %s72
      %s76 = sphi 0, %s75
      %s92 = sphi 0, %s76
    $region4: #{tpu_custom_call.1} parent=1 // loop_header_branch
      %18 = sbr.rel (%p16) target = $region8
    $region5: #{tpu_custom_call.1} parent=1 // loop_body
      %s20 = ssub.s32 %s15, 1
      %s21 = ssub.s32 %s15, 2
      %s22 = sadd.s32 %s15, 1
      %s24 = sadd.s32 %s23, 1
      %p27 = scmp.eq.s32.totalorder %s15, 3
      %p28 = scmp.ne.s32.totalorder %s23, %s25
      %p29 = scmp.eq.s32.totalorder %s15, 0
      %p30 = por %p28, %p29
      %p31 = scmp.ne.s32.totalorder %s23, %s25
      %p32 = scmp.eq.s32.totalorder %s20, 3
      %p33 = por %p31, %p32
      %p34 = scmp.ne.s32.totalorder %s25, %s26
      %p35 = scmp.eq.s32.totalorder %s20, 0
      %p36 = por %p34, %p35
      %p37 = scmp.ne.s32.totalorder %s25, %s26
      %p38 = scmp.eq.s32.totalorder %s21, 3
      %p39 = por %p37, %p38
      %p41 = scmp.ne.s32.totalorder %s26, %s40
      %p42 = scmp.eq.s32.totalorder %s21, 0
      %p43 = por %p41, %p42
      %s44 = ssub.s32 %s15, %s22
      %p45 = scmp.eq.s32.totalorder %s44, 0
      %s47 = sadd.s32 %s46, 1
      %s48 = scalar_select %p45, %s46, %s47
      %p51 = pneg %p45
      %p52 = scmp.eq.s32.totalorder %s15, 3
      %p53 = por %p51, %p52
      %p54 = scmp.ne.s32.totalorder %s46, %s49
      %p55 = scmp.eq.s32.totalorder %s15, 0
      %p56 = por %p54, %p55
      %p57 = scmp.ne.s32.totalorder %s46, %s49
      %p58 = scmp.eq.s32.totalorder %s20, 3
      %p59 = por %p57, %p58
      %p60 = scmp.ne.s32.totalorder %s49, %s50
      %p61 = scmp.eq.s32.totalorder %s20, 0
      %p62 = por %p60, %p61
      %p63 = scmp.ne.s32.totalorder %s49, %s50
      %p64 = scmp.eq.s32.totalorder %s21, 3
      %p65 = por %p63, %p64
      %p67 = scmp.ne.s32.totalorder %s50, %s66
      %p68 = scmp.eq.s32.totalorder %s21, 0
      %p69 = por %p67, %p68
      %s70 = ssub.s32 %s15, %s22
      %p71 = scmp.eq.s32.totalorder %s70, 0
      %s73 = sadd.s32 %s72, 1
      %s74 = scalar_select %p71, %s72, %s73
      %p77 = pneg %p71
      %p78 = scmp.eq.s32.totalorder %s15, 3
      %p79 = por %p77, %p78
      %p80 = scmp.ne.s32.totalorder %s72, %s75
      %p81 = scmp.eq.s32.totalorder %s15, 0
      %p82 = por %p80, %p81
      %p83 = scmp.ne.s32.totalorder %s72, %s75
      %p84 = scmp.eq.s32.totalorder %s20, 3
      %p85 = por %p83, %p84
      %p86 = scmp.ne.s32.totalorder %s75, %s76
      %p87 = scmp.eq.s32.totalorder %s20, 0
      %p88 = por %p86, %p87
      %p89 = scmp.ne.s32.totalorder %s75, %s76
      %p90 = scmp.eq.s32.totalorder %s21, 3
      %p91 = por %p89, %p90
      %p93 = scmp.ne.s32.totalorder %s76, %s92
      %p94 = scmp.eq.s32.totalorder %s21, 0
      %p95 = por %p93, %p94
      %p96 = scmp.le.s32.totalorder 1, %s15
      %p97 = scmp.lt.s32.totalorder %s15, 5
      %p98 = pnand %p96, %p97
      %p99 = pneg %p98
      // Predicated region
      $region9: #{tpu_custom_call.1} parent=5 // pred_check
        _
      $region10: #{tpu_custom_call.1} parent=5 // pred_check_branch
        %101 = sbr.rel (%p98) target = $region12
      $region11: #{tpu_custom_call.1} parent=5 // pred_region
        %s102 = ssub.s32 %s15, 1
        // Predicated region
        $region13: #{tpu_custom_call.1} parent=11 // pred_check
          %p103 = pneg %p36
        $region14: #{tpu_custom_call.1} parent=11 // pred_check_branch
          %105 = sbr.rel (%p103) target = $region16
        $region15: #{tpu_custom_call.1} parent=11 // pred_region
          %s107 = ssub.s32 16, 16
          %108 = vsyncadd [#allocation5], %s107
          %111 = dma.hbm_to_smem %s0, 16, [#allocation2], [#allocation5]
        $region16: #{tpu_custom_call.1} parent=11 // pred_fallthru
          _
      $region12: #{tpu_custom_call.1} parent=5 // pred_fallthru
        _
      %p112 = scmp.lt.s32.totalorder %s15, 4
      // Predicated region
      $region17: #{tpu_custom_call.1} parent=5 // pred_check
        %p113 = pneg %p112
      $region18: #{tpu_custom_call.1} parent=5 // pred_check_branch
        %115 = sbr.rel (%p113) target = $region20
      $region19: #{tpu_custom_call.1} parent=5 // pred_region
        // Predicated region
        $region21: #{tpu_custom_call.1} parent=19 // pred_check
          %p116 = pneg %p56
        $region22: #{tpu_custom_call.1} parent=19 // pred_check_branch
          %118 = sbr.rel (%p116) target = $region24
        $region23: #{tpu_custom_call.1} parent=19 // pred_region
          %s119 = sand.u32 %s46, 1
          %s120 = scalar_lea.sflag [#allocation3], %s119
          %s121 = sand.u32 %s46, 1
          %s122 = smul.addr %s121, 32
          %s123 = scalar_lea.vmem [#allocation6], %s122
          %s124 = smul.u32 4, %s15
          %s126 = ssub.s32 512, 512
          %127 = vsyncadd %s120, %s126
          %s128 = smul.addr %s124, 128
          %s129 = scalar_lea.hbm %s1, %s128
          %s130 = sshll.u32 %s123, 4
          %s131 = int_to_ptr.vmem [resolvable:$true] %s130
          %136 = dma.hbm_to_vmem [thread:$0]  %s129, 512, %s131, %s120, 128, 128, 8
        $region24: #{tpu_custom_call.1} parent=19 // pred_fallthru
          _
      $region20: #{tpu_custom_call.1} parent=5 // pred_fallthru
        _
      %p137 = scmp.le.s32.totalorder 1, %s15
      %p138 = scmp.lt.s32.totalorder %s15, 5
      %p139 = pnand %p137, %p138
      %p140 = pneg %p139
      // Predicated region
      $region25: #{tpu_custom_call.1} parent=5 // pred_check
        _
      $region26: #{tpu_custom_call.1} parent=5 // pred_check_branch
        %142 = sbr.rel (%p139) target = $region28
      $region27: #{tpu_custom_call.1} parent=5 // pred_region
        %s143 = ssub.s32 %s15, 1
        // Predicated region
        $region29: #{tpu_custom_call.1} parent=27 // pred_check
          %p144 = pneg %p36
        $region30: #{tpu_custom_call.1} parent=27 // pred_check_branch
          %146 = sbr.rel (%p144) target = $region32
        $region31: #{tpu_custom_call.1} parent=27 // pred_region
          %147 = dma.done [#allocation5], 16
        $region32: #{tpu_custom_call.1} parent=27 // pred_fallthru
          _
        %s148 = sand.u32 %s49, 1
        %s149 = scalar_lea.sflag [#allocation3], %s148
        %s150 = sand.u32 %s49, 1
        %s151 = smul.addr %s150, 32
        %s152 = scalar_lea.vmem [#allocation6], %s151
        // Predicated region
        $region33: #{tpu_custom_call.1} parent=27 // pred_check
          %p153 = pneg %p62
        $region34: #{tpu_custom_call.1} parent=27 // pred_check_branch
          %155 = sbr.rel (%p153) target = $region36
        $region35: #{tpu_custom_call.1} parent=27 // pred_region
          %156 = dma.done %s149, 512
        $region36: #{tpu_custom_call.1} parent=27 // pred_fallthru
          _
        %157 = sfence
        %p158 = pneg %p36
        %p159 = pneg %p33
        %s160 = sand.u32 %s49, 1
        %s161 = scalar_lea.sflag [#allocation3], %s160
        %s162 = sand.u32 %s49, 1
        %s163 = smul.addr %s162, 32
        %s164 = scalar_lea.vmem [#allocation6], %s163
        %p165 = pneg %p62
        %p166 = pneg %p59
        %p167 = pneg %p88
        %p168 = pneg %p85
        %s169 = sand.u32 %s75, 1
        %s170 = scalar_lea.sflag [#allocation4], %s169
        %s171 = sand.u32 %s75, 1
        %s172 = smul.addr %s171, 160
        %s173 = scalar_lea.vmem [#allocation7], %s172
        %s174 = smul.u32 4, %s20
        %s175 = smul.u32 4, %s20
        %s176 = sld [smem:[#allocation2]]
        %s177 = sld [smem:[#allocation2 + $0x1]]
        %s178 = sld [smem:[#allocation2 + $0x2]]
        %s179 = sld [smem:[#allocation2 + $0x3]]
        %s180 = sld [smem:[#allocation2 + $0x4]]
        %s181 = sld [smem:[#allocation2 + $0x5]]
        %s182 = sld [smem:[#allocation2 + $0x6]]
        %v183 = vld [vmem:[%s152] sm:$0xff]
        %v184 = vld [vmem:[%s152 + $0x8] sm:$0xff]
        %v185 = vld [vmem:[%s152 + $0x10] sm:$0xff]
        %v186 = vld [vmem:[%s152 + $0x18] sm:$0xff]
        %v187 = vstv %s180
        %v188 = vmul.f32 %v183, %v187
        %v189 = vmul.f32 %v184, %v187
        %v190 = vmul.f32 %v185, %v187
        %v191 = vmul.f32 %v186, %v187
        %v192 = vand.u32 2147483647, %v183
        %v193 = vand.u32 2147483647, %v184
        %v194 = vand.u32 2147483647, %v185
        %v195 = vand.u32 2147483647, %v186
        %v196 = vstv %s178
        %v197 = vsub.f32 %v192, %v196
        %v198 = vsub.f32 %v193, %v196
        %v199 = vsub.f32 %v194, %v196
        %v200 = vsub.f32 %v195, %v196
        %v201 = vmax.f32 %v197, 0.0
        %v202 = vmax.f32 %v198, 0.0
        %v203 = vmax.f32 %v199, 0.0
        %v204 = vmax.f32 %v200, 0.0
        %v205 = vstv %s181
        %v206 = vmin.f32 %v201, %v205
        %v207 = vmin.f32 %v202, %v205
        %v208 = vmin.f32 %v203, %v205
        %v209 = vmin.f32 %v204, %v205
        %v210 = vstv %s176
        %v211 = vmul.f32 %v210, %v206
        %v212 = vmul.f32 %v210, %v207
        %v213 = vmul.f32 %v210, %v208
        %v214 = vmul.f32 %v210, %v209
        %v215 = vstv %s179
        %v216 = vsub.f32 %v192, %v215
        %v217 = vsub.f32 %v193, %v215
        %v218 = vsub.f32 %v194, %v215
        %v219 = vsub.f32 %v195, %v215
        %v220 = vmax.f32 %v216, 0.0
        %v221 = vmax.f32 %v217, 0.0
        %v222 = vmax.f32 %v218, 0.0
        %v223 = vmax.f32 %v219, 0.0
        %v224 = vstv %s177
        %v225 = vmul.f32 %v224, %v220
        %v226 = vmul.f32 %v224, %v221
        %v227 = vmul.f32 %v224, %v222
        %v228 = vmul.f32 %v224, %v223
        %v229 = vadd.f32 %v211, %v225
        %v230 = vadd.f32 %v212, %v226
        %v231 = vadd.f32 %v213, %v227
        %v232 = vadd.f32 %v214, %v228
        %v237 = vand.u32 %v183, 2147483648
        %v238 = vand.u32 %v184, 2147483648
        %v239 = vand.u32 %v185, 2147483648
        %v240 = vand.u32 %v186, 2147483648
        %v245 = vor.u32 %v229, %v237
        %v246 = vor.u32 %v230, %v238
        %v247 = vor.u32 %v231, %v239
        %v248 = vor.u32 %v232, %v240
        %253 = vst [vmem:[%s173] sm:$0xff] %v245
        %254 = vst [vmem:[%s173 + $0x8] sm:$0xff] %v246
        %255 = vst [vmem:[%s173 + $0x10] sm:$0xff] %v247
        %256 = vst [vmem:[%s173 + $0x18] sm:$0xff] %v248
        %v257 = vstv %s182
        %v258 = vmul.f32 %v245, %v257
        %v259 = vmul.f32 %v246, %v257
        %v260 = vmul.f32 %v247, %v257
        %v261 = vmul.f32 %v248, %v257
        %v262 = vadd.f32 %v258, %v188
        %v263 = vadd.f32 %v259, %v189
        %v264 = vadd.f32 %v260, %v190
        %v265 = vadd.f32 %v261, %v191
        %v266 = vand.u32 2147483647, %v262
        %v267 = vand.u32 2147483647, %v263
        %v268 = vand.u32 2147483647, %v264
        %v269 = vand.u32 2147483647, %v265
        %v270 = vsub.f32 %v266, %v196
        %v271 = vsub.f32 %v267, %v196
        %v272 = vsub.f32 %v268, %v196
        %v273 = vsub.f32 %v269, %v196
        %v274 = vmax.f32 %v270, 0.0
        %v275 = vmax.f32 %v271, 0.0
        %v276 = vmax.f32 %v272, 0.0
        %v277 = vmax.f32 %v273, 0.0
        %v278 = vmin.f32 %v274, %v205
        %v279 = vmin.f32 %v275, %v205
        %v280 = vmin.f32 %v276, %v205
        %v281 = vmin.f32 %v277, %v205
        %v282 = vmul.f32 %v210, %v278
        %v283 = vmul.f32 %v210, %v279
        %v284 = vmul.f32 %v210, %v280
        %v285 = vmul.f32 %v210, %v281
        %v286 = vsub.f32 %v266, %v215
        %v287 = vsub.f32 %v267, %v215
        %v288 = vsub.f32 %v268, %v215
        %v289 = vsub.f32 %v269, %v215
        %v290 = vmax.f32 %v286, 0.0
        %v291 = vmax.f32 %v287, 0.0
        %v292 = vmax.f32 %v288, 0.0
        %v293 = vmax.f32 %v289, 0.0
        %v294 = vmul.f32 %v224, %v290
        %v295 = vmul.f32 %v224, %v291
        %v296 = vmul.f32 %v224, %v292
        %v297 = vmul.f32 %v224, %v293
        %v298 = vadd.f32 %v282, %v294
        %v299 = vadd.f32 %v283, %v295
        %v300 = vadd.f32 %v284, %v296
        %v301 = vadd.f32 %v285, %v297
        %v306 = vand.u32 %v262, 2147483648
        %v307 = vand.u32 %v263, 2147483648
        %v308 = vand.u32 %v264, 2147483648
        %v309 = vand.u32 %v265, 2147483648
        %v314 = vor.u32 %v298, %v306
        %v315 = vor.u32 %v299, %v307
        %v316 = vor.u32 %v300, %v308
        %v317 = vor.u32 %v301, %v309
        %s322 = scalar_lea.vmem %s173, 32 [#allocation7]
        %323 = vst [vmem:[%s322] sm:$0xff] %v314
        %324 = vst [vmem:[%s322 + $0x8] sm:$0xff] %v315
        %325 = vst [vmem:[%s322 + $0x10] sm:$0xff] %v316
        %326 = vst [vmem:[%s322 + $0x18] sm:$0xff] %v317
        %v327 = vmul.f32 %v314, %v257
        %v328 = vmul.f32 %v315, %v257
        %v329 = vmul.f32 %v316, %v257
        %v330 = vmul.f32 %v317, %v257
        %v331 = vadd.f32 %v327, %v188
        %v332 = vadd.f32 %v328, %v189
        %v333 = vadd.f32 %v329, %v190
        %v334 = vadd.f32 %v330, %v191
        %v335 = vand.u32 2147483647, %v331
        %v336 = vand.u32 2147483647, %v332
        %v337 = vand.u32 2147483647, %v333
        %v338 = vand.u32 2147483647, %v334
        %v339 = vsub.f32 %v335, %v196
        %v340 = vsub.f32 %v336, %v196
        %v341 = vsub.f32 %v337, %v196
        %v342 = vsub.f32 %v338, %v196
        %v343 = vmax.f32 %v339, 0.0
        %v344 = vmax.f32 %v340, 0.0
        %v345 = vmax.f32 %v341, 0.0
        %v346 = vmax.f32 %v342, 0.0
        %v347 = vmin.f32 %v343, %v205
        %v348 = vmin.f32 %v344, %v205
        %v349 = vmin.f32 %v345, %v205
        %v350 = vmin.f32 %v346, %v205
        %v351 = vmul.f32 %v210, %v347
        %v352 = vmul.f32 %v210, %v348
        %v353 = vmul.f32 %v210, %v349
        %v354 = vmul.f32 %v210, %v350
        %v355 = vsub.f32 %v335, %v215
        %v356 = vsub.f32 %v336, %v215
        %v357 = vsub.f32 %v337, %v215
        %v358 = vsub.f32 %v338, %v215
        %v359 = vmax.f32 %v355, 0.0
        %v360 = vmax.f32 %v356, 0.0
        %v361 = vmax.f32 %v357, 0.0
        %v362 = vmax.f32 %v358, 0.0
        %v363 = vmul.f32 %v224, %v359
        %v364 = vmul.f32 %v224, %v360
        %v365 = vmul.f32 %v224, %v361
        %v366 = vmul.f32 %v224, %v362
        %v367 = vadd.f32 %v351, %v363
        %v368 = vadd.f32 %v352, %v364
        %v369 = vadd.f32 %v353, %v365
        %v370 = vadd.f32 %v354, %v366
        %v375 = vand.u32 %v331, 2147483648
        %v376 = vand.u32 %v332, 2147483648
        %v377 = vand.u32 %v333, 2147483648
        %v378 = vand.u32 %v334, 2147483648
        %v383 = vor.u32 %v367, %v375
        %v384 = vor.u32 %v368, %v376
        %v385 = vor.u32 %v369, %v377
        %v386 = vor.u32 %v370, %v378
        %s391 = scalar_lea.vmem %s173, 64 [#allocation7]
        %392 = vst [vmem:[%s391] sm:$0xff] %v383
        %393 = vst [vmem:[%s391 + $0x8] sm:$0xff] %v384
        %394 = vst [vmem:[%s391 + $0x10] sm:$0xff] %v385
        %395 = vst [vmem:[%s391 + $0x18] sm:$0xff] %v386
        %v396 = vmul.f32 %v383, %v257
        %v397 = vmul.f32 %v384, %v257
        %v398 = vmul.f32 %v385, %v257
        %v399 = vmul.f32 %v386, %v257
        %v400 = vadd.f32 %v396, %v188
        %v401 = vadd.f32 %v397, %v189
        %v402 = vadd.f32 %v398, %v190
        %v403 = vadd.f32 %v399, %v191
        %v404 = vand.u32 2147483647, %v400
        %v405 = vand.u32 2147483647, %v401
        %v406 = vand.u32 2147483647, %v402
        %v407 = vand.u32 2147483647, %v403
        %v408 = vsub.f32 %v404, %v196
        %v409 = vsub.f32 %v405, %v196
        %v410 = vsub.f32 %v406, %v196
        %v411 = vsub.f32 %v407, %v196
        %v412 = vmax.f32 %v408, 0.0
        %v413 = vmax.f32 %v409, 0.0
        %v414 = vmax.f32 %v410, 0.0
        %v415 = vmax.f32 %v411, 0.0
        %v416 = vmin.f32 %v412, %v205
        %v417 = vmin.f32 %v413, %v205
        %v418 = vmin.f32 %v414, %v205
        %v419 = vmin.f32 %v415, %v205
        %v420 = vmul.f32 %v210, %v416
        %v421 = vmul.f32 %v210, %v417
        %v422 = vmul.f32 %v210, %v418
        %v423 = vmul.f32 %v210, %v419
        %v424 = vsub.f32 %v404, %v215
        %v425 = vsub.f32 %v405, %v215
        %v426 = vsub.f32 %v406, %v215
        %v427 = vsub.f32 %v407, %v215
        %v428 = vmax.f32 %v424, 0.0
        %v429 = vmax.f32 %v425, 0.0
        %v430 = vmax.f32 %v426, 0.0
        %v431 = vmax.f32 %v427, 0.0
        %v432 = vmul.f32 %v224, %v428
        %v433 = vmul.f32 %v224, %v429
        %v434 = vmul.f32 %v224, %v430
        %v435 = vmul.f32 %v224, %v431
        %v436 = vadd.f32 %v420, %v432
        %v437 = vadd.f32 %v421, %v433
        %v438 = vadd.f32 %v422, %v434
        %v439 = vadd.f32 %v423, %v435
        %v444 = vand.u32 %v400, 2147483648
        %v445 = vand.u32 %v401, 2147483648
        %v446 = vand.u32 %v402, 2147483648
        %v447 = vand.u32 %v403, 2147483648
        %v452 = vor.u32 %v436, %v444
        %v453 = vor.u32 %v437, %v445
        %v454 = vor.u32 %v438, %v446
        %v455 = vor.u32 %v439, %v447
        %s460 = scalar_lea.vmem %s173, 96 [#allocation7]
        %461 = vst [vmem:[%s460] sm:$0xff] %v452
        %462 = vst [vmem:[%s460 + $0x8] sm:$0xff] %v453
        %463 = vst [vmem:[%s460 + $0x10] sm:$0xff] %v454
        %464 = vst [vmem:[%s460 + $0x18] sm:$0xff] %v455
        %v465 = vmul.f32 %v452, %v257
        %v466 = vmul.f32 %v453, %v257
        %v467 = vmul.f32 %v454, %v257
        %v468 = vmul.f32 %v455, %v257
        %v469 = vadd.f32 %v465, %v188
        %v470 = vadd.f32 %v466, %v189
        %v471 = vadd.f32 %v467, %v190
        %v472 = vadd.f32 %v468, %v191
        %v473 = vand.u32 2147483647, %v469
        %v474 = vand.u32 2147483647, %v470
        %v475 = vand.u32 2147483647, %v471
        %v476 = vand.u32 2147483647, %v472
        %v477 = vsub.f32 %v473, %v196
        %v478 = vsub.f32 %v474, %v196
        %v479 = vsub.f32 %v475, %v196
        %v480 = vsub.f32 %v476, %v196
        %v481 = vmax.f32 %v477, 0.0
        %v482 = vmax.f32 %v478, 0.0
        %v483 = vmax.f32 %v479, 0.0
        %v484 = vmax.f32 %v480, 0.0
        %v485 = vmin.f32 %v481, %v205
        %v486 = vmin.f32 %v482, %v205
        %v487 = vmin.f32 %v483, %v205
        %v488 = vmin.f32 %v484, %v205
        %v489 = vmul.f32 %v210, %v485
        %v490 = vmul.f32 %v210, %v486
        %v491 = vmul.f32 %v210, %v487
        %v492 = vmul.f32 %v210, %v488
        %v493 = vsub.f32 %v473, %v215
        %v494 = vsub.f32 %v474, %v215
        %v495 = vsub.f32 %v475, %v215
        %v496 = vsub.f32 %v476, %v215
        %v497 = vmax.f32 %v493, 0.0
        %v498 = vmax.f32 %v494, 0.0
        %v499 = vmax.f32 %v495, 0.0
        %v500 = vmax.f32 %v496, 0.0
        %v501 = vmul.f32 %v224, %v497
        %v502 = vmul.f32 %v224, %v498
        %v503 = vmul.f32 %v224, %v499
        %v504 = vmul.f32 %v224, %v500
        %v505 = vadd.f32 %v489, %v501
        %v506 = vadd.f32 %v490, %v502
        %v507 = vadd.f32 %v491, %v503
        %v508 = vadd.f32 %v492, %v504
        %v513 = vand.u32 %v469, 2147483648
        %v514 = vand.u32 %v470, 2147483648
        %v515 = vand.u32 %v471, 2147483648
        %v516 = vand.u32 %v472, 2147483648
        %v521 = vor.u32 %v505, %v513
        %v522 = vor.u32 %v506, %v514
        %v523 = vor.u32 %v507, %v515
        %v524 = vor.u32 %v508, %v516
        %s529 = scalar_lea.vmem %s173, 128 [#allocation7]
        %530 = vst [vmem:[%s529] sm:$0xff] %v521
        %531 = vst [vmem:[%s529 + $0x8] sm:$0xff] %v522
        %532 = vst [vmem:[%s529 + $0x10] sm:$0xff] %v523
        %533 = vst [vmem:[%s529 + $0x18] sm:$0xff] %v524
        %s534 = sand.u32 %s75, 1
        %s535 = scalar_lea.sflag [#allocation4], %s534
        %s536 = sand.u32 %s75, 1
        %s537 = smul.addr %s536, 160
        %s538 = scalar_lea.vmem [#allocation7], %s537
        // Predicated region
        $region37: #{tpu_custom_call.1} parent=27 // pred_check
          %p539 = pneg %p85
        $region38: #{tpu_custom_call.1} parent=27 // pred_check_branch
          %541 = sbr.rel (%p539) target = $region40
        $region39: #{tpu_custom_call.1} parent=27 // pred_region
          #allocation9 [shape = 'u32[6]{0}', space=smem, size = 0x18, scoped, tag = 'DMA stride descriptor']
          %s542 = smul.u32 4, %s20
          %s544 = ssub.s32 2560, 2560
          %545 = vsyncadd %s535, %s544
          %s546 = smul.addr %s542, 128
          %s547 = scalar_lea.hbm %s2, %s546
          %s549 = sshll.u32 1, 14
          %s550 = sxor.u32 4294967295, %s549
          %s553 = sshll.u32 7, 18
          %s554 = sxor.u32 4294967295, %s553
          %s555 = sand.u32 0, %s554
          %s557 = sor.u32 %s555, 0
          %s559 = sshll.u32 3, 24
          %s560 = sxor.u32 4294967295, %s559
          %s561 = sand.u32 %s557, %s560
          %s563 = sor.u32 %s561, 0
          %s564 = sshll.u32 %s538, 4
          %s565 = int_to_ptr.vmem [resolvable:$true] %s564
          %571 = sst [smem:[#allocation9]] 512
          %s572 = scalar_lea.smem [#allocation9], 1
          %573 = sst [smem:[%s572]] 2048
          %s574 = scalar_lea.smem [#allocation9], 2
          %575 = sst [smem:[%s574]] 4
          %s576 = scalar_lea.smem [#allocation9], 3
          %577 = sst [smem:[%s576]] 128
          %s578 = scalar_lea.smem [#allocation9], 4
          %579 = sst [smem:[%s578]] 128
          %s580 = scalar_lea.smem [#allocation9], 5
          %581 = sst [smem:[%s580]] 8
          %583 = dma.general %s565, 2560, %s547, %s535, [#allocation8], [#allocation9], %s563, 0
        $region40: #{tpu_custom_call.1} parent=27 // pred_fallthru
          _
      $region28: #{tpu_custom_call.1} parent=5 // pred_fallthru
        _
      %p584 = scmp.le.s32.totalorder 2, %s15
      // Predicated region
      $region41: #{tpu_custom_call.1} parent=5 // pred_check
        %p585 = pneg %p584
      $region42: #{tpu_custom_call.1} parent=5 // pred_check_branch
        %587 = sbr.rel (%p585) target = $region44
      $region43: #{tpu_custom_call.1} parent=5 // pred_region
        %s588 = ssub.s32 %s15, 2
        // Predicated region
        $region45: #{tpu_custom_call.1} parent=43 // pred_check
          %p589 = pneg %p91
        $region46: #{tpu_custom_call.1} parent=43 // pred_check_branch
          %591 = sbr.rel (%p589) target = $region48
        $region47: #{tpu_custom_call.1} parent=43 // pred_region
          %s592 = sand.u32 %s76, 1
          %s593 = scalar_lea.sflag [#allocation4], %s592
          %s594 = sand.u32 %s76, 1
          %s595 = smul.addr %s594, 160
          %s596 = scalar_lea.vmem [#allocation7], %s595
          %597 = dma.done %s593, 2560
        $region48: #{tpu_custom_call.1} parent=43 // pred_fallthru
          _
      $region44: #{tpu_custom_call.1} parent=5 // pred_fallthru
        _
    $region6: #{tpu_custom_call.1} parent=1 // loop_footer
      %s19 = sadd.s32 1, %s15
    $region7: #{tpu_custom_call.1} parent=1 // loop_footer_branch
      %14 = sbr.rel target = $region3
    $region8: #{tpu_custom_call.1} parent=1 // loop_exit
      _
    %598 = vsyncpa [#allocation3], 1
    %s599 = scalar_lea.sflag [#allocation3], 1
    %600 = vsyncpa %s599, 1
    %601 = vsyncpa [#allocation4], 1
    %s602 = scalar_lea.sflag [#allocation4], 1
    %603 = vsyncpa %s602, 1
    %604 = vsyncpa [#allocation5], 1
    %s605 = scalar_lea.sflag [#allocation5], 1
    %606 = vsyncpa %s605, 1

</llo_original>
